<compile_context>
chip_gen: v7x
topology: tpu7x:2x2x1
jax: 0.10.0
libtpu: 0.0.40
codegen_flags: <defaults>
</compile_context>

<pallas_src>
import math
import functools

import jax
import jax.numpy as jnp
from jax import lax
from jax.experimental import pallas as pl
from jax.experimental.pallas import tpu as pltpu


# Fits v7x's 64 MiB/TC with headroom; well below v5e/v6e physical VMEM.
_VMEM_LIMIT = 48 * 1024 * 1024


def _pick_tile(n, target):
    """Largest divisor of n that is <= target and a multiple of 8 (else n itself)."""
    if n <= target:
        return n
    for t in range(target - target % 8, 7, -8):
        if n % t == 0:
            return t
    return n


# ---------------------------------------------------------------------------
# Kernel 1: pose merge + fused QKV projection, per-head output layout
# ---------------------------------------------------------------------------
def _merge_qkv_kernel(h_ref, p_ref, wm_ref, bm_ref, wqkv_ref, bqkv_ref,
                      q_ref, k_ref, v_ref, *, heads, head_dim, pose_scale, sm_scale):
    h = h_ref[0]                                   # (tr, H) f32
    p = p_ref[0]                                   # (tr, H) f32
    hidden = h.shape[-1]

    # x = qkv_merge(h + pose) * pose_scale + h   (bf16 matmul, f32 accumulate/residual)
    merged = jnp.dot((h + p).astype(jnp.bfloat16), wm_ref[...],
                     preferred_element_type=jnp.float32) + bm_ref[...]
    x = merged * pose_scale + h                    # (tr, H) f32

    # Fused q/k/v projection: a single wide (H, 3H) MXU matmul (long N cadence).
    qkv = jnp.dot(x.astype(jnp.bfloat16), wqkv_ref[...],
                  preferred_element_type=jnp.float32) + bqkv_ref[...]   # (tr, 3H) f32

    # One-off relayout per row tile into (heads, tr, head_dim) blocks; the softmax
    # scale is folded into q here so the flash kernel never scales the score tile.
    for i in range(heads):
        lo = i * head_dim
        q_ref[0, i] = (qkv[:, lo:lo + head_dim] * sm_scale).astype(q_ref.dtype)
        k_ref[0, i] = qkv[:, hidden + lo:hidden + lo + head_dim].astype(k_ref.dtype)
        v_ref[0, i] = qkv[:, 2 * hidden + lo:2 * hidden + lo + head_dim].astype(v_ref.dtype)


# ---------------------------------------------------------------------------
# Kernel 2: flash attention (online softmax over kv tiles)
# ---------------------------------------------------------------------------
def _flash_attn_kernel(q_ref, k_ref, v_ref, o_ref, m_sc, l_sc, acc_sc):
    ki = pl.program_id(3)

    @pl.when(ki == 0)
    def _init():
        m_sc[...] = jnp.full(m_sc.shape, -jnp.inf, dtype=m_sc.dtype)
        l_sc[...] = jnp.zeros(l_sc.shape, dtype=l_sc.dtype)
        acc_sc[...] = jnp.zeros(acc_sc.shape, dtype=acc_sc.dtype)

    q = q_ref[0, 0]                                # (tq, hd) bf16, pre-scaled
    k = k_ref[0, 0]                                # (tk, hd) bf16
    v = v_ref[0, 0]                                # (tk, hd) bf16

    # QK^T as NT dot_general: MXU contracts the last dims natively, no k.T relayout.
    s = lax.dot_general(q, k, (((1,), (1,)), ((), ())),
                        preferred_element_type=jnp.float32)      # (tq, tk) f32

    m_prev = m_sc[...]
    m_new = jnp.maximum(m_prev, jnp.max(s, axis=-1, keepdims=True))
    alpha = jnp.exp(m_prev - m_new)
    p = jnp.exp(s - m_new)
    l_sc[...] = alpha * l_sc[...] + jnp.sum(p, axis=-1, keepdims=True)
    acc_sc[...] = alpha * acc_sc[...] + jnp.dot(p.astype(v.dtype), v,
                                                preferred_element_type=jnp.float32)
    m_sc[...] = m_new

    @pl.when(ki == pl.num_programs(3) - 1)
    def _finalize():
        inv_l = pl.reciprocal(l_sc[...], approx=True)
        o_ref[0, 0] = (acc_sc[...] * inv_l).astype(o_ref.dtype)


# ---------------------------------------------------------------------------
# Kernel 3: output projection + residual + rescale
# ---------------------------------------------------------------------------
def _out_proj_kernel(a_ref, h_ref, wo_ref, bo_ref, o_ref, *, heads, inv_rescale):
    parts = [a_ref[0, i] for i in range(heads)]               # each (tr, hd) f32
    a = parts[0] if heads == 1 else jnp.concatenate(parts, axis=-1)   # (tr, H)
    out = jnp.dot(a.astype(jnp.bfloat16), wo_ref[...],
                  preferred_element_type=jnp.float32) + bo_ref[...]
    out = (out + h_ref[0]) * inv_rescale
    o_ref[0] = out.astype(o_ref.dtype)


# ---------------------------------------------------------------------------
# Wrapper
# ---------------------------------------------------------------------------
def pose_adaptor_attention(hidden_states, pose_feature, params, *, heads,
                           pose_scale=1.0, rescale=1.0,
                           row_tile=256, q_tile=256, kv_tile=512):
    B, S, H = hidden_states.shape
    assert pose_feature.shape == (B, S, H)
    assert H % heads == 0
    hd = H // heads
    sm_scale = 1.0 / math.sqrt(hd)

    f32, bf16 = jnp.float32, jnp.bfloat16
    wm = params["wm"].astype(bf16)
    bm = params["bm"].astype(f32)
    wqkv = jnp.concatenate([params["wq"], params["wk"], params["wv"]], axis=1).astype(bf16)
    bqkv = jnp.concatenate([params["bq"], params["bk"], params["bv"]], axis=1).astype(f32)
    wo = params["wo"].astype(bf16)
    bo = params["bo"].astype(f32)

    tr = _pick_tile(S, row_tile)
    tq = _pick_tile(S, q_tile)
    tk = _pick_tile(S, kv_tile)

    row_spec = pl.BlockSpec((1, tr, H), lambda b, r: (b, r, 0))
    headrow_spec = pl.BlockSpec((1, heads, tr, hd), lambda b, r: (b, 0, r, 0))
    wm_spec = pl.BlockSpec((H, H), lambda b, r: (0, 0))
    bm_spec = pl.BlockSpec((1, H), lambda b, r: (0, 0))
    wqkv_spec = pl.BlockSpec((H, 3 * H), lambda b, r: (0, 0))
    bqkv_spec = pl.BlockSpec((1, 3 * H), lambda b, r: (0, 0))

    qkv_struct = jax.ShapeDtypeStruct((B, heads, S, hd), bf16)

    # --- stage 1: merge + fused QKV projection ---
    q, k, v = pl.pallas_call(
        functools.partial(_merge_qkv_kernel, heads=heads, head_dim=hd,
                          pose_scale=float(pose_scale), sm_scale=sm_scale),
        out_shape=(qkv_struct, qkv_struct, qkv_struct),
        grid_spec=pltpu.PrefetchScalarGridSpec(
            num_scalar_prefetch=0,
            grid=(B, S // tr),
            in_specs=[row_spec, row_spec, wm_spec, bm_spec, wqkv_spec, bqkv_spec],
            out_specs=(headrow_spec, headrow_spec, headrow_spec)),
        compiler_params=pltpu.CompilerParams(
            dimension_semantics=("parallel", "parallel"),
            vmem_limit_bytes=_VMEM_LIMIT),
    )(hidden_states, pose_feature, wm, bm, wqkv, bqkv)

    # --- stage 2: flash attention ---
    attn = pl.pallas_call(
        _flash_attn_kernel,
        out_shape=jax.ShapeDtypeStruct((B, heads, S, hd), f32),
        grid_spec=pltpu.PrefetchScalarGridSpec(
            num_scalar_prefetch=0,
            grid=(B, heads, S // tq, S // tk),
            in_specs=[pl.BlockSpec((1, 1, tq, hd), lambda b, h, qi, ki: (b, h, qi, 0)),
                      pl.BlockSpec((1, 1, tk, hd), lambda b, h, qi, ki: (b, h, ki, 0)),
                      pl.BlockSpec((1, 1, tk, hd), lambda b, h, qi, ki: (b, h, ki, 0))],
            out_specs=pl.BlockSpec((1, 1, tq, hd), lambda b, h, qi, ki: (b, h, qi, 0)),
            scratch_shapes=[pltpu.VMEM((tq, 1), jnp.float32),
                            pltpu.VMEM((tq, 1), jnp.float32),
                            pltpu.VMEM((tq, hd), jnp.float32)]),
        compiler_params=pltpu.CompilerParams(
            dimension_semantics=("parallel", "parallel", "parallel", "arbitrary"),
            vmem_limit_bytes=_VMEM_LIMIT),
    )(q, k, v)

    # --- stage 3: output projection + residual + rescale ---
    out = pl.pallas_call(
        functools.partial(_out_proj_kernel, heads=heads,
                          inv_rescale=1.0 / float(rescale)),
        out_shape=jax.ShapeDtypeStruct((B, S, H), hidden_states.dtype),
        grid_spec=pltpu.PrefetchScalarGridSpec(
            num_scalar_prefetch=0,
            grid=(B, S // tr),
            in_specs=[headrow_spec, row_spec, wm_spec, bm_spec],
            out_specs=row_spec),
        compiler_params=pltpu.CompilerParams(
            dimension_semantics=("parallel", "parallel"),
            vmem_limit_bytes=_VMEM_LIMIT),
    )(attn, hidden_states, wo, bo)

    return out


# ---------------------------------------------------------------------------
# Pure-JAX reference of the same forward pass (f32, for verification)
# ---------------------------------------------------------------------------
def _reference(hidden_states, pose_feature, params, *, heads, pose_scale, rescale):
    B, S, H = hidden_states.shape
    hd = H // heads
    h = hidden_states
    merged = (h + pose_feature) @ params["wm"] + params["bm"]
    x = merged * pose_scale + h
    q = x @ params["wq"] + params["bq"]
    k = x @ params["wk"] + params["bk"]
    v = x @ params["wv"] + params["bv"]
    q = q.reshape(B, S, heads, hd).transpose(0, 2, 1, 3)
    k = k.reshape(B, S, heads, hd).transpose(0, 2, 1, 3)
    v = v.reshape(B, S, heads, hd).transpose(0, 2, 1, 3)
    s = jnp.einsum("bhqd,bhkd->bhqk", q, k) / math.sqrt(hd)
    p = jax.nn.softmax(s, axis=-1)
    o = jnp.einsum("bhqk,bhkd->bhqd", p, v)
    o = o.transpose(0, 2, 1, 3).reshape(B, S, H)
    o = o @ params["wo"] + params["bo"]
    return (o + h) / rescale


if __name__ == "__main__":
    B, S, H, HEADS = 2, 16, 32, 2
    POSE_SCALE = 1.0
    RESCALE = 1.0

    key = jax.random.PRNGKey(0)
    ks = jax.random.split(key, 12)

    hidden_states = jax.random.normal(ks[0], (B, S, H), dtype=jnp.float32)
    pose_feature = jax.random.normal(ks[1], (B, S, H), dtype=jnp.float32)

    def lin(kw, kb, scale=0.05):
        # (in, out) layout == torch Linear weight (out, in) pre-transposed.
        w = scale * jax.random.normal(kw, (H, H), dtype=jnp.float32)
        b = scale * jax.random.normal(kb, (1, H), dtype=jnp.float32)
        return w, b

    # NOTE: PyTorch inits qkv_merge to zeros; small random values are used here so
    # the pose-conditioning path is actually exercised numerically.
    wm, bm = lin(ks[2], ks[3])
    wq, bq = lin(ks[4], ks[5])
    wk, bk = lin(ks[6], ks[7])
    wv, bv = lin(ks[8], ks[9])
    wo, bo = lin(ks[10], ks[11])

    params = dict(wm=wm, bm=bm, wq=wq, bq=bq, wk=wk, bk=bk,
                  wv=wv, bv=bv, wo=wo, bo=bo)

    out = pose_adaptor_attention(hidden_states, pose_feature, params,
                                 heads=HEADS, pose_scale=POSE_SCALE, rescale=RESCALE)
    out = jax.block_until_ready(out)

    ref = _reference(hidden_states, pose_feature, params,
                     heads=HEADS, pose_scale=POSE_SCALE, rescale=RESCALE)
    assert out.shape == (B, S, H)
    max_err = jnp.max(jnp.abs(out - ref))
    # bf16 matmuls + approx reciprocal -> looser tolerance than pure-f32.
    assert jnp.allclose(out, ref, atol=2e-2, rtol=2e-2), \
        f"mismatch vs JAX reference (max abs err {max_err})"

    print("KERNEL_OK")
</pallas_src>

<mosaic_0001>
module attributes {stable_mosaic.version = 11 : i64} {
  func.func @_merge_qkv_kernel(%arg0: i32, %arg1: i32, %arg2: memref<1x16x32xf32, #tpu.memory_space<vmem>>, %arg3: memref<1x16x32xf32, #tpu.memory_space<vmem>>, %arg4: memref<32x32xbf16, #tpu.memory_space<vmem>>, %arg5: memref<1x32xf32, #tpu.memory_space<vmem>>, %arg6: memref<32x96xbf16, #tpu.memory_space<vmem>>, %arg7: memref<1x96xf32, #tpu.memory_space<vmem>>, %arg8: memref<1x2x16x16xbf16, #tpu.memory_space<vmem>>, %arg9: memref<1x2x16x16xbf16, #tpu.memory_space<vmem>>, %arg10: memref<1x2x16x16xbf16, #tpu.memory_space<vmem>>) attributes {dimension_semantics = [#tpu.dimension_semantics<parallel>, #tpu.dimension_semantics<parallel>], iteration_bounds = array<i64: 2, 1>, scalar_prefetch = 0 : i64, scratch_operands = 0 : i64, tpu.core_type = #tpu.core_type<tc>, window_params = [{transform_indices = @transform_0, window_bounds = array<i64: 1, 16, 32>}, {transform_indices = @transform_1, window_bounds = array<i64: 1, 16, 32>}, {pipeline_mode = #tpu.pipeline_mode<synchronous>, transform_indices = @transform_2, window_bounds = array<i64: 32, 32>}, {pipeline_mode = #tpu.pipeline_mode<synchronous>, transform_indices = @transform_3, window_bounds = array<i64: 1, 32>}, {pipeline_mode = #tpu.pipeline_mode<synchronous>, transform_indices = @transform_4, window_bounds = array<i64: 32, 96>}, {pipeline_mode = #tpu.pipeline_mode<synchronous>, transform_indices = @transform_5, window_bounds = array<i64: 1, 96>}, {transform_indices = @transform_6, window_bounds = array<i64: 1, 2, 16, 16>}, {transform_indices = @transform_7, window_bounds = array<i64: 1, 2, 16, 16>}, {transform_indices = @transform_8, window_bounds = array<i64: 1, 2, 16, 16>}]} {
    %c0 = arith.constant 0 : index
    %c0_0 = arith.constant 0 : index
    %c0_1 = arith.constant 0 : index
    %0 = vector.load %arg2[%c0, %c0_0, %c0_1] : memref<1x16x32xf32, #tpu.memory_space<vmem>>, vector<1x16x32xf32>
    %1 = vector.shape_cast %0 : vector<1x16x32xf32> to vector<16x32xf32>
    %c0_2 = arith.constant 0 : index
    %c0_3 = arith.constant 0 : index
    %c0_4 = arith.constant 0 : index
    %2 = vector.load %arg3[%c0_2, %c0_3, %c0_4] : memref<1x16x32xf32, #tpu.memory_space<vmem>>, vector<1x16x32xf32>
    %3 = vector.shape_cast %2 : vector<1x16x32xf32> to vector<16x32xf32>
    %4 = arith.addf %1, %3 : vector<16x32xf32>
    %5 = arith.truncf %4 : vector<16x32xf32> to vector<16x32xbf16>
    %c0_5 = arith.constant 0 : index
    %c0_6 = arith.constant 0 : index
    %6 = vector.load %arg4[%c0_5, %c0_6] : memref<32x32xbf16, #tpu.memory_space<vmem>>, vector<32x32xbf16>
    %cst = arith.constant dense<0.000000e+00> : vector<16x32xf32>
    %7 = tpu.matmul %5, %6, %cst {dimension_numbers = #tpu.dot_dimension_numbers<[1], [0], [0], [1], [0, 0, 1, 1], [], []>} : vector<16x32xbf16>, vector<32x32xbf16>, vector<16x32xf32> -> vector<16x32xf32>
    %c0_7 = arith.constant 0 : index
    %c0_8 = arith.constant 0 : index
    %8 = vector.load %arg5[%c0_7, %c0_8] : memref<1x32xf32, #tpu.memory_space<vmem>>, vector<1x32xf32>
    %9 = vector.broadcast %8 : vector<1x32xf32> to vector<16x32xf32>
    %10 = arith.addf %7, %9 : vector<16x32xf32>
    %cst_9 = arith.constant 1.000000e+00 : f32
    %11 = vector.broadcast %cst_9 : f32 to vector<16x32xf32>
    %12 = arith.mulf %10, %11 : vector<16x32xf32>
    %13 = arith.addf %12, %1 : vector<16x32xf32>
    %14 = arith.truncf %13 : vector<16x32xf32> to vector<16x32xbf16>
    %c0_10 = arith.constant 0 : index
    %c0_11 = arith.constant 0 : index
    %15 = vector.load %arg6[%c0_10, %c0_11] : memref<32x96xbf16, #tpu.memory_space<vmem>>, vector<32x96xbf16>
    %cst_12 = arith.constant dense<0.000000e+00> : vector<16x96xf32>
    %16 = tpu.matmul %14, %15, %cst_12 {dimension_numbers = #tpu.dot_dimension_numbers<[1], [0], [0], [1], [0, 0, 1, 1], [], []>} : vector<16x32xbf16>, vector<32x96xbf16>, vector<16x96xf32> -> vector<16x96xf32>
    %c0_13 = arith.constant 0 : index
    %c0_14 = arith.constant 0 : index
    %17 = vector.load %arg7[%c0_13, %c0_14] : memref<1x96xf32, #tpu.memory_space<vmem>>, vector<1x96xf32>
    %18 = vector.broadcast %17 : vector<1x96xf32> to vector<16x96xf32>
    %19 = arith.addf %16, %18 : vector<16x96xf32>
    %20 = vector.extract_strided_slice %19 {offsets = [0, 0], sizes = [16, 16], strides = [1, 1]} : vector<16x96xf32> to vector<16x16xf32>
    %cst_15 = arith.constant 2.500000e-01 : f32
    %21 = vector.broadcast %cst_15 : f32 to vector<16x16xf32>
    %22 = arith.mulf %20, %21 : vector<16x16xf32>
    %23 = arith.truncf %22 : vector<16x16xf32> to vector<16x16xbf16>
    %c0_16 = arith.constant 0 : index
    %c0_17 = arith.constant 0 : index
    %c0_18 = arith.constant 0 : index
    %c0_19 = arith.constant 0 : index
    %24 = vector.load %arg8[%c0_16, %c0_17, %c0_18, %c0_19] : memref<1x2x16x16xbf16, #tpu.memory_space<vmem>>, vector<1x1x16x16xbf16>
    %25 = vector.shape_cast %24 : vector<1x1x16x16xbf16> to vector<16x16xbf16>
    %26 = vector.shape_cast %23 : vector<16x16xbf16> to vector<1x1x16x16xbf16>
    tpu.vector_store %arg8[%c0_16, %c0_17, %c0_18, %c0_19], %26 {strides = array<i32>} : memref<1x2x16x16xbf16, #tpu.memory_space<vmem>>, vector<1x1x16x16xbf16>,
    %27 = vector.extract_strided_slice %19 {offsets = [0, 32], sizes = [16, 16], strides = [1, 1]} : vector<16x96xf32> to vector<16x16xf32>
    %28 = arith.truncf %27 : vector<16x16xf32> to vector<16x16xbf16>
    %c0_20 = arith.constant 0 : index
    %c0_21 = arith.constant 0 : index
    %c0_22 = arith.constant 0 : index
    %c0_23 = arith.constant 0 : index
    %29 = vector.load %arg9[%c0_20, %c0_21, %c0_22, %c0_23] : memref<1x2x16x16xbf16, #tpu.memory_space<vmem>>, vector<1x1x16x16xbf16>
    %30 = vector.shape_cast %29 : vector<1x1x16x16xbf16> to vector<16x16xbf16>
    %31 = vector.shape_cast %28 : vector<16x16xbf16> to vector<1x1x16x16xbf16>
    tpu.vector_store %arg9[%c0_20, %c0_21, %c0_22, %c0_23], %31 {strides = array<i32>} : memref<1x2x16x16xbf16, #tpu.memory_space<vmem>>, vector<1x1x16x16xbf16>,
    %32 = vector.extract_strided_slice %19 {offsets = [0, 64], sizes = [16, 16], strides = [1, 1]} : vector<16x96xf32> to vector<16x16xf32>
    %33 = arith.truncf %32 : vector<16x16xf32> to vector<16x16xbf16>
    %c0_24 = arith.constant 0 : index
    %c0_25 = arith.constant 0 : index
    %c0_26 = arith.constant 0 : index
    %c0_27 = arith.constant 0 : index
    %34 = vector.load %arg10[%c0_24, %c0_25, %c0_26, %c0_27] : memref<1x2x16x16xbf16, #tpu.memory_space<vmem>>, vector<1x1x16x16xbf16>
    %35 = vector.shape_cast %34 : vector<1x1x16x16xbf16> to vector<16x16xbf16>
    %36 = vector.shape_cast %33 : vector<16x16xbf16> to vector<1x1x16x16xbf16>
    tpu.vector_store %arg10[%c0_24, %c0_25, %c0_26, %c0_27], %36 {strides = array<i32>} : memref<1x2x16x16xbf16, #tpu.memory_space<vmem>>, vector<1x1x16x16xbf16>,
    %37 = vector.extract_strided_slice %19 {offsets = [0, 16], sizes = [16, 16], strides = [1, 1]} : vector<16x96xf32> to vector<16x16xf32>
    %cst_28 = arith.constant 2.500000e-01 : f32
    %38 = vector.broadcast %cst_28 : f32 to vector<16x16xf32>
    %39 = arith.mulf %37, %38 : vector<16x16xf32>
    %40 = arith.truncf %39 : vector<16x16xf32> to vector<16x16xbf16>
    %c0_29 = arith.constant 0 : index
    %c1 = arith.constant 1 : index
    %c0_30 = arith.constant 0 : index
    %c0_31 = arith.constant 0 : index
    %41 = vector.load %arg8[%c0_29, %c1, %c0_30, %c0_31] : memref<1x2x16x16xbf16, #tpu.memory_space<vmem>>, vector<1x1x16x16xbf16>
    %42 = vector.shape_cast %41 : vector<1x1x16x16xbf16> to vector<16x16xbf16>
    %43 = vector.shape_cast %40 : vector<16x16xbf16> to vector<1x1x16x16xbf16>
    tpu.vector_store %arg8[%c0_29, %c1, %c0_30, %c0_31], %43 {strides = array<i32>} : memref<1x2x16x16xbf16, #tpu.memory_space<vmem>>, vector<1x1x16x16xbf16>,
    %44 = vector.extract_strided_slice %19 {offsets = [0, 48], sizes = [16, 16], strides = [1, 1]} : vector<16x96xf32> to vector<16x16xf32>
    %45 = arith.truncf %44 : vector<16x16xf32> to vector<16x16xbf16>
    %c0_32 = arith.constant 0 : index
    %c1_33 = arith.constant 1 : index
    %c0_34 = arith.constant 0 : index
    %c0_35 = arith.constant 0 : index
    %46 = vector.load %arg9[%c0_32, %c1_33, %c0_34, %c0_35] : memref<1x2x16x16xbf16, #tpu.memory_space<vmem>>, vector<1x1x16x16xbf16>
    %47 = vector.shape_cast %46 : vector<1x1x16x16xbf16> to vector<16x16xbf16>
    %48 = vector.shape_cast %45 : vector<16x16xbf16> to vector<1x1x16x16xbf16>
    tpu.vector_store %arg9[%c0_32, %c1_33, %c0_34, %c0_35], %48 {strides = array<i32>} : memref<1x2x16x16xbf16, #tpu.memory_space<vmem>>, vector<1x1x16x16xbf16>,
    %49 = vector.extract_strided_slice %19 {offsets = [0, 80], sizes = [16, 16], strides = [1, 1]} : vector<16x96xf32> to vector<16x16xf32>
    %50 = arith.truncf %49 : vector<16x16xf32> to vector<16x16xbf16>
    %c0_36 = arith.constant 0 : index
    %c1_37 = arith.constant 1 : index
    %c0_38 = arith.constant 0 : index
    %c0_39 = arith.constant 0 : index
    %51 = vector.load %arg10[%c0_36, %c1_37, %c0_38, %c0_39] : memref<1x2x16x16xbf16, #tpu.memory_space<vmem>>, vector<1x1x16x16xbf16>
    %52 = vector.shape_cast %51 : vector<1x1x16x16xbf16> to vector<16x16xbf16>
    %53 = vector.shape_cast %50 : vector<16x16xbf16> to vector<1x1x16x16xbf16>
    tpu.vector_store %arg10[%c0_36, %c1_37, %c0_38, %c0_39], %53 {strides = array<i32>} : memref<1x2x16x16xbf16, #tpu.memory_space<vmem>>, vector<1x1x16x16xbf16>,
    return
  }
  func.func @transform_0(%arg0: i32, %arg1: i32) -> (i32, i32, i32) {
    %c0_i32 = arith.constant 0 : i32
    %c0_i32_0 = arith.constant 0 : i32
    return %arg0, %arg1, %c0_i32 : i32, i32, i32
  }
  func.func @transform_1(%arg0: i32, %arg1: i32) -> (i32, i32, i32) {
    %c0_i32 = arith.constant 0 : i32
    %c0_i32_0 = arith.constant 0 : i32
    return %arg0, %arg1, %c0_i32 : i32, i32, i32
  }
  func.func @transform_2(%arg0: i32, %arg1: i32) -> (i32, i32) {
    %c0_i32 = arith.constant 0 : i32
    %c0_i32_0 = arith.constant 0 : i32
    %c0_i32_1 = arith.constant 0 : i32
    return %c0_i32, %c0_i32_0 : i32, i32
  }
  func.func @transform_3(%arg0: i32, %arg1: i32) -> (i32, i32) {
    %c0_i32 = arith.constant 0 : i32
    %c0_i32_0 = arith.constant 0 : i32
    %c0_i32_1 = arith.constant 0 : i32
    return %c0_i32, %c0_i32_0 : i32, i32
  }
  func.func @transform_4(%arg0: i32, %arg1: i32) -> (i32, i32) {
    %c0_i32 = arith.constant 0 : i32
    %c0_i32_0 = arith.constant 0 : i32
    %c0_i32_1 = arith.constant 0 : i32
    return %c0_i32, %c0_i32_0 : i32, i32
  }
  func.func @transform_5(%arg0: i32, %arg1: i32) -> (i32, i32) {
    %c0_i32 = arith.constant 0 : i32
    %c0_i32_0 = arith.constant 0 : i32
    %c0_i32_1 = arith.constant 0 : i32
    return %c0_i32, %c0_i32_0 : i32, i32
  }
  func.func @transform_6(%arg0: i32, %arg1: i32) -> (i32, i32, i32, i32) {
    %c0_i32 = arith.constant 0 : i32
    %c0_i32_0 = arith.constant 0 : i32
    %c0_i32_1 = arith.constant 0 : i32
    return %arg0, %c0_i32, %arg1, %c0_i32_0 : i32, i32, i32, i32
  }
  func.func @transform_7(%arg0: i32, %arg1: i32) -> (i32, i32, i32, i32) {
    %c0_i32 = arith.constant 0 : i32
    %c0_i32_0 = arith.constant 0 : i32
    %c0_i32_1 = arith.constant 0 : i32
    return %arg0, %c0_i32, %arg1, %c0_i32_0 : i32, i32, i32, i32
  }
  func.func @transform_8(%arg0: i32, %arg1: i32) -> (i32, i32, i32, i32) {
    %c0_i32 = arith.constant 0 : i32
    %c0_i32_0 = arith.constant 0 : i32
    %c0_i32_1 = arith.constant 0 : i32
    return %arg0, %c0_i32, %arg1, %c0_i32_0 : i32, i32, i32, i32
  }
}

</mosaic_0001>

<llo_original>
// kernel: tpu_custom_call.1
$region0: #{tpu_custom_call.1}
  #allocation0 [shape = 'u32[]', space=smem, size = 0x4, offset = 0x4, fixed_abs, tag = 'smem constant byte address 0x4 - core index']
  #allocation1 [shape = 'u32[144,128]{1,0:T(1,128)}', space=vmem, size = 0x12000, scoped, tag = 'internal scratch']
  %s0 = inlined_call_operand.hbm [shape: f32[2,16,32], index: 0, kind: input, shape index: {}]
  %s1 = inlined_call_operand.hbm [shape: f32[2,16,32], index: 1, kind: input, shape index: {}]
  %s2 = inlined_call_operand.hbm [shape: bf16[32,32], index: 2, kind: input, shape index: {}]
  %s3 = inlined_call_operand.vmem [shape: f32[1,32], index: 3, kind: input, shape index: {}]
  %s4 = inlined_call_operand.hbm [shape: bf16[32,96], index: 4, kind: input, shape index: {}]
  %s5 = inlined_call_operand.vmem [shape: f32[1,96], index: 5, kind: input, shape index: {}]
  %s6 = inlined_call_operand.hbm [shape: bf16[2,2,16,16], index: 6, kind: output, shape index: {0}]
  %s7 = inlined_call_operand.hbm [shape: bf16[2,2,16,16], index: 7, kind: output, shape index: {1}]
  %s8 = inlined_call_operand.hbm [shape: bf16[2,2,16,16], index: 8, kind: output, shape index: {2}]
  %9 = xla_tuple %s6, %s7, %s8
  %s10 = sld [smem:[#allocation0]]
  $region89: #{tpu_custom_call.1} parent=0
    _
  %s12 = ssub.s32 1, %s10
  %s13 = scalar_select 0, %s12, %s10
  $region1: #{tpu_custom_call.1} parent=0
    #allocation2 [shape = 'u8[16384]{0}', space=vmem, size = 0x4000, scoped, tag = 'input window, operand 0']
    #allocation3 [shape = 's32[2]{0}', space=sflag, size = 0x8, scoped, tag = 'scoped memory for tpu_custom_call.1']
    #allocation4 [shape = 's32[2]{0}', space=sflag, size = 0x8, scoped, tag = 'scoped memory for tpu_custom_call.1']
    #allocation5 [shape = 'u8[16384]{0}', space=vmem, size = 0x4000, scoped, tag = 'input window, operand 1']
    #allocation6 [shape = 's32[2]{0}', space=sflag, size = 0x8, scoped, tag = 'scoped memory for tpu_custom_call.1']
    #allocation7 [shape = 'u8[8192]{0}', space=vmem, size = 0x2000, scoped, tag = 'input window, operand 2, single buffered']
    #allocation8 [shape = 'u8[8192]{0}', space=vmem, size = 0x2000, scoped, tag = 'input window, operand 4, single buffered']
    #allocation9 [shape = 's32[1]{0}', space=sflag, size = 0x4, scoped, tag = 'scoped memory for tpu_custom_call.1']
    #allocation10 [shape = 'u8[16384]{0}', space=vmem, size = 0x4000, scoped, tag = 'output window, operand 0']
    #allocation11 [shape = 'u8[16384]{0}', space=vmem, size = 0x4000, scoped, tag = 'output window, operand 1']
    #allocation12 [shape = 's32[2]{0}', space=sflag, size = 0x8, scoped, tag = 'scoped memory for tpu_custom_call.1']
    #allocation13 [shape = 'u8[16384]{0}', space=vmem, size = 0x4000, scoped, tag = 'output window, operand 2']
    %14 = vsyncpa [#allocation3], 0
    %s15 = scalar_lea.sflag [#allocation3], 1
    %16 = vsyncpa %s15, 0
    %17 = vsyncpa [#allocation6], 0
    %s18 = scalar_lea.sflag [#allocation6], 1
    %19 = vsyncpa %s18, 0
    %20 = vsyncpa [#allocation9], 0
    %21 = vsyncpa [#allocation4], 0
    %s22 = scalar_lea.sflag [#allocation4], 1
    %23 = vsyncpa %s22, 0
    %24 = vsyncpa [#allocation12], 0
    %s25 = scalar_lea.sflag [#allocation12], 1
    %26 = vsyncpa %s25, 0
    loop: start=0, step=1, limit=4
    $region2: #{tpu_custom_call.1} parent=1 // loop_pre_header
      _
    $region3: #{tpu_custom_call.1} parent=1 // loop_header
      %s28 = sphi 0, %s32
      %p29 = scmp.ge.s32.totalorder %s28, 4
      %s35 = sphi 0, %s47
      %s36 = sphi 0, %s43
      %s37 = sphi 0, %s35
      %s38 = sphi 0, %s36
      %s39 = sphi 0, %s37
      %s40 = sphi 0, %s38
      %s52 = sphi 0, %s54
      %s55 = sphi 0, %s52
      %s56 = sphi 0, %s55
      %s72 = sphi 0, %s56
      %s80 = sphi 0, %s82
      %s83 = sphi 0, %s80
      %s84 = sphi 0, %s83
      %s100 = sphi 0, %s84
      %s104 = sphi 0, %s104
      %s106 = sphi 0, %s104
      %s107 = sphi 0, %s106
      %s121 = sphi 0, %s107
      %s125 = sphi 0, %s125
      %s127 = sphi 0, %s125
      %s128 = sphi 0, %s127
      %s142 = sphi 0, %s128
      %s146 = sphi 0, %s146
      %s148 = sphi 0, %s146
      %s149 = sphi 0, %s148
      %s163 = sphi 0, %s149
      %s167 = sphi 0, %s167
      %s169 = sphi 0, %s167
      %s170 = sphi 0, %s169
      %s184 = sphi 0, %s170
      %s192 = sphi 0, %s194
      %s195 = sphi 0, %s192
      %s196 = sphi 0, %s195
      %s212 = sphi 0, %s196
      %s220 = sphi 0, %s222
      %s223 = sphi 0, %s220
      %s224 = sphi 0, %s223
      %s240 = sphi 0, %s224
      %s248 = sphi 0, %s250
      %s251 = sphi 0, %s248
      %s252 = sphi 0, %s251
      %s268 = sphi 0, %s252
    $region4: #{tpu_custom_call.1} parent=1 // loop_header_branch
      %31 = sbr.rel (%p29) target = $region8
    $region5: #{tpu_custom_call.1} parent=1 // loop_body
      %s33 = ssub.s32 %s28, 1
      %s34 = ssub.s32 %s28, 2
      %s41 = sadd.s32 1, %s36
      %p42 = scmp.ge.s32.totalorder %s41, 1
      %s43 = scalar_select %p42, 0, %s41
      %s44 = sadd.s32 1, %s35
      %s45 = scalar_select %p42, %s44, %s35
      %p46 = scmp.ge.s32.totalorder %s45, 2
      %s47 = scalar_select %p46, 0, %s45
      %s48 = ssub.s32 %s35, %s47
      %s49 = ssub.s32 %s36, %s43
      %s50 = sor.u32 %s48, %s49
      %p51 = scmp.eq.s32.totalorder %s50, 0
      %s53 = sadd.s32 %s52, 1
      %s54 = scalar_select %p51, %s52, %s53
      %p57 = pneg %p51
      %p58 = scmp.eq.s32.totalorder %s28, 1
      %p59 = por %p57, %p58
      %p60 = scmp.ne.s32.totalorder %s52, %s55
      %p61 = scmp.eq.s32.totalorder %s28, 0
      %p62 = por %p60, %p61
      %p63 = scmp.ne.s32.totalorder %s52, %s55
      %p64 = scmp.eq.s32.totalorder %s33, 1
      %p65 = por %p63, %p64
      %p66 = scmp.ne.s32.totalorder %s55, %s56
      %p67 = scmp.eq.s32.totalorder %s33, 0
      %p68 = por %p66, %p67
      %p69 = scmp.ne.s32.totalorder %s55, %s56
      %p70 = scmp.eq.s32.totalorder %s34, 1
      %p71 = por %p69, %p70
      %p73 = scmp.ne.s32.totalorder %s56, %s72
      %p74 = scmp.eq.s32.totalorder %s34, 0
      %p75 = por %p73, %p74
      %s76 = ssub.s32 %s35, %s47
      %s77 = ssub.s32 %s36, %s43
      %s78 = sor.u32 %s76, %s77
      %p79 = scmp.eq.s32.totalorder %s78, 0
      %s81 = sadd.s32 %s80, 1
      %s82 = scalar_select %p79, %s80, %s81
      %p85 = pneg %p79
      %p86 = scmp.eq.s32.totalorder %s28, 1
      %p87 = por %p85, %p86
      %p88 = scmp.ne.s32.totalorder %s80, %s83
      %p89 = scmp.eq.s32.totalorder %s28, 0
      %p90 = por %p88, %p89
      %p91 = scmp.ne.s32.totalorder %s80, %s83
      %p92 = scmp.eq.s32.totalorder %s33, 1
      %p93 = por %p91, %p92
      %p94 = scmp.ne.s32.totalorder %s83, %s84
      %p95 = scmp.eq.s32.totalorder %s33, 0
      %p96 = por %p94, %p95
      %p97 = scmp.ne.s32.totalorder %s83, %s84
      %p98 = scmp.eq.s32.totalorder %s34, 1
      %p99 = por %p97, %p98
      %p101 = scmp.ne.s32.totalorder %s84, %s100
      %p102 = scmp.eq.s32.totalorder %s34, 0
      %p103 = por %p101, %p102
      %s105 = sadd.s32 %s104, 1
      %p108 = scmp.eq.s32.totalorder %s28, 1
      %p109 = scmp.ne.s32.totalorder %s104, %s106
      %p110 = scmp.eq.s32.totalorder %s28, 0
      %p111 = por %p109, %p110
      %p112 = scmp.ne.s32.totalorder %s104, %s106
      %p113 = scmp.eq.s32.totalorder %s33, 1
      %p114 = por %p112, %p113
      %p115 = scmp.ne.s32.totalorder %s106, %s107
      %p116 = scmp.eq.s32.totalorder %s33, 0
      %p117 = por %p115, %p116
      %p118 = scmp.ne.s32.totalorder %s106, %s107
      %p119 = scmp.eq.s32.totalorder %s34, 1
      %p120 = por %p118, %p119
      %p122 = scmp.ne.s32.totalorder %s107, %s121
      %p123 = scmp.eq.s32.totalorder %s34, 0
      %p124 = por %p122, %p123
      %s126 = sadd.s32 %s125, 1
      %p129 = scmp.eq.s32.totalorder %s28, 1
      %p130 = scmp.ne.s32.totalorder %s125, %s127
      %p131 = scmp.eq.s32.totalorder %s28, 0
      %p132 = por %p130, %p131
      %p133 = scmp.ne.s32.totalorder %s125, %s127
      %p134 = scmp.eq.s32.totalorder %s33, 1
      %p135 = por %p133, %p134
      %p136 = scmp.ne.s32.totalorder %s127, %s128
      %p137 = scmp.eq.s32.totalorder %s33, 0
      %p138 = por %p136, %p137
      %p139 = scmp.ne.s32.totalorder %s127, %s128
      %p140 = scmp.eq.s32.totalorder %s34, 1
      %p141 = por %p139, %p140
      %p143 = scmp.ne.s32.totalorder %s128, %s142
      %p144 = scmp.eq.s32.totalorder %s34, 0
      %p145 = por %p143, %p144
      %s147 = sadd.s32 %s146, 1
      %p150 = scmp.eq.s32.totalorder %s28, 1
      %p151 = scmp.ne.s32.totalorder %s146, %s148
      %p152 = scmp.eq.s32.totalorder %s28, 0
      %p153 = por %p151, %p152
      %p154 = scmp.ne.s32.totalorder %s146, %s148
      %p155 = scmp.eq.s32.totalorder %s33, 1
      %p156 = por %p154, %p155
      %p157 = scmp.ne.s32.totalorder %s148, %s149
      %p158 = scmp.eq.s32.totalorder %s33, 0
      %p159 = por %p157, %p158
      %p160 = scmp.ne.s32.totalorder %s148, %s149
      %p161 = scmp.eq.s32.totalorder %s34, 1
      %p162 = por %p160, %p161
      %p164 = scmp.ne.s32.totalorder %s149, %s163
      %p165 = scmp.eq.s32.totalorder %s34, 0
      %p166 = por %p164, %p165
      %s168 = sadd.s32 %s167, 1
      %p171 = scmp.eq.s32.totalorder %s28, 1
      %p172 = scmp.ne.s32.totalorder %s167, %s169
      %p173 = scmp.eq.s32.totalorder %s28, 0
      %p174 = por %p172, %p173
      %p175 = scmp.ne.s32.totalorder %s167, %s169
      %p176 = scmp.eq.s32.totalorder %s33, 1
      %p177 = por %p175, %p176
      %p178 = scmp.ne.s32.totalorder %s169, %s170
      %p179 = scmp.eq.s32.totalorder %s33, 0
      %p180 = por %p178, %p179
      %p181 = scmp.ne.s32.totalorder %s169, %s170
      %p182 = scmp.eq.s32.totalorder %s34, 1
      %p183 = por %p181, %p182
      %p185 = scmp.ne.s32.totalorder %s170, %s184
      %p186 = scmp.eq.s32.totalorder %s34, 0
      %p187 = por %p185, %p186
      %s188 = ssub.s32 %s35, %s47
      %s189 = ssub.s32 %s36, %s43
      %s190 = sor.u32 %s188, %s189
      %p191 = scmp.eq.s32.totalorder %s190, 0
      %s193 = sadd.s32 %s192, 1
      %s194 = scalar_select %p191, %s192, %s193
      %p197 = pneg %p191
      %p198 = scmp.eq.s32.totalorder %s28, 1
      %p199 = por %p197, %p198
      %p200 = scmp.ne.s32.totalorder %s192, %s195
      %p201 = scmp.eq.s32.totalorder %s28, 0
      %p202 = por %p200, %p201
      %p203 = scmp.ne.s32.totalorder %s192, %s195
      %p204 = scmp.eq.s32.totalorder %s33, 1
      %p205 = por %p203, %p204
      %p206 = scmp.ne.s32.totalorder %s195, %s196
      %p207 = scmp.eq.s32.totalorder %s33, 0
      %p208 = por %p206, %p207
      %p209 = scmp.ne.s32.totalorder %s195, %s196
      %p210 = scmp.eq.s32.totalorder %s34, 1
      %p211 = por %p209, %p210
      %p213 = scmp.ne.s32.totalorder %s196, %s212
      %p214 = scmp.eq.s32.totalorder %s34, 0
      %p215 = por %p213, %p214
      %s216 = ssub.s32 %s35, %s47
      %s217 = ssub.s32 %s36, %s43
      %s218 = sor.u32 %s216, %s217
      %p219 = scmp.eq.s32.totalorder %s218, 0
      %s221 = sadd.s32 %s220, 1
      %s222 = scalar_select %p219, %s220, %s221
      %p225 = pneg %p219
      %p226 = scmp.eq.s32.totalorder %s28, 1
      %p227 = por %p225, %p226
      %p228 = scmp.ne.s32.totalorder %s220, %s223
      %p229 = scmp.eq.s32.totalorder %s28, 0
      %p230 = por %p228, %p229
      %p231 = scmp.ne.s32.totalorder %s220, %s223
      %p232 = scmp.eq.s32.totalorder %s33, 1
      %p233 = por %p231, %p232
      %p234 = scmp.ne.s32.totalorder %s223, %s224
      %p235 = scmp.eq.s32.totalorder %s33, 0
      %p236 = por %p234, %p235
      %p237 = scmp.ne.s32.totalorder %s223, %s224
      %p238 = scmp.eq.s32.totalorder %s34, 1
      %p239 = por %p237, %p238
      %p241 = scmp.ne.s32.totalorder %s224, %s240
      %p242 = scmp.eq.s32.totalorder %s34, 0
      %p243 = por %p241, %p242
      %s244 = ssub.s32 %s35, %s47
      %s245 = ssub.s32 %s36, %s43
      %s246 = sor.u32 %s244, %s245
      %p247 = scmp.eq.s32.totalorder %s246, 0
      %s249 = sadd.s32 %s248, 1
      %s250 = scalar_select %p247, %s248, %s249
      %p253 = pneg %p247
      %p254 = scmp.eq.s32.totalorder %s28, 1
      %p255 = por %p253, %p254
      %p256 = scmp.ne.s32.totalorder %s248, %s251
      %p257 = scmp.eq.s32.totalorder %s28, 0
      %p258 = por %p256, %p257
      %p259 = scmp.ne.s32.totalorder %s248, %s251
      %p260 = scmp.eq.s32.totalorder %s33, 1
      %p261 = por %p259, %p260
      %p262 = scmp.ne.s32.totalorder %s251, %s252
      %p263 = scmp.eq.s32.totalorder %s33, 0
      %p264 = por %p262, %p263
      %p265 = scmp.ne.s32.totalorder %s251, %s252
      %p266 = scmp.eq.s32.totalorder %s34, 1
      %p267 = por %p265, %p266
      %p269 = scmp.ne.s32.totalorder %s252, %s268
      %p270 = scmp.eq.s32.totalorder %s34, 0
      %p271 = por %p269, %p270
      %p272 = scmp.le.s32.totalorder 1, %s28
      %p273 = scmp.lt.s32.totalorder %s28, 3
      %p274 = pnand %p272, %p273
      %p275 = pneg %p274
      // Predicated region
      $region9: #{tpu_custom_call.1} parent=5 // pred_check
        _
      $region10: #{tpu_custom_call.1} parent=5 // pred_check_branch
        %277 = sbr.rel (%p274) target = $region12
      $region11: #{tpu_custom_call.1} parent=5 // pred_region
        %s278 = ssub.s32 %s28, 1
        // Predicated region
        $region13: #{tpu_custom_call.1} parent=11 // pred_check
          %p279 = pneg %p117
        $region14: #{tpu_custom_call.1} parent=11 // pred_check_branch
          %281 = sbr.rel (%p279) target = $region16
        $region15: #{tpu_custom_call.1} parent=11 // pred_region
          %s283 = ssub.s32 256, 256
          %284 = vsyncadd [#allocation6], %s283
          %s285 = sshll.u32 [#allocation7], 4
          %s286 = int_to_ptr.vmem [resolvable:$true] %s285
          %291 = dma.hbm_to_vmem [thread:$0]  %s2, 256, %s286, [#allocation6], 64, 64, 4
        $region16: #{tpu_custom_call.1} parent=11 // pred_fallthru
          _
        // Predicated region
        $region17: #{tpu_custom_call.1} parent=11 // pred_check
          %p292 = pneg %p138
        $region18: #{tpu_custom_call.1} parent=11 // pred_check_branch
          %294 = sbr.rel (%p292) target = $region20
        $region19: #{tpu_custom_call.1} parent=11 // pred_region
          _
        $region20: #{tpu_custom_call.1} parent=11 // pred_fallthru
          _
        // Predicated region
        $region21: #{tpu_custom_call.1} parent=11 // pred_check
          %p295 = pneg %p159
        $region22: #{tpu_custom_call.1} parent=11 // pred_check_branch
          %297 = sbr.rel (%p295) target = $region24
        $region23: #{tpu_custom_call.1} parent=11 // pred_region
          %s299 = ssub.s32 256, 256
          %300 = vsyncadd [#allocation9], %s299
          %s301 = sshll.u32 [#allocation8], 4
          %s302 = int_to_ptr.vmem [resolvable:$true] %s301
          %307 = dma.hbm_to_vmem [thread:$0]  %s4, 256, %s302, [#allocation9], 64, 64, 4
        $region24: #{tpu_custom_call.1} parent=11 // pred_fallthru
          _
        // Predicated region
        $region25: #{tpu_custom_call.1} parent=11 // pred_check
          %p308 = pneg %p180
        $region26: #{tpu_custom_call.1} parent=11 // pred_check_branch
          %310 = sbr.rel (%p308) target = $region28
        $region27: #{tpu_custom_call.1} parent=11 // pred_region
          _
        $region28: #{tpu_custom_call.1} parent=11 // pred_fallthru
          _
      $region12: #{tpu_custom_call.1} parent=5 // pred_fallthru
        _
      %p311 = scmp.lt.s32.totalorder %s28, 2
      // Predicated region
      $region29: #{tpu_custom_call.1} parent=5 // pred_check
        %p312 = pneg %p311
      $region30: #{tpu_custom_call.1} parent=5 // pred_check_branch
        %314 = sbr.rel (%p312) target = $region32
      $region31: #{tpu_custom_call.1} parent=5 // pred_region
        // Predicated region
        $region33: #{tpu_custom_call.1} parent=31 // pred_check
          %p315 = pneg %p62
        $region34: #{tpu_custom_call.1} parent=31 // pred_check_branch
          %317 = sbr.rel (%p315) target = $region36
        $region35: #{tpu_custom_call.1} parent=31 // pred_region
          %s318 = sand.u32 %s52, 1
          %s319 = scalar_lea.sflag [#allocation3], %s318
          %s320 = sand.u32 %s52, 1
          %s321 = smul.addr %s320, 16
          %s322 = scalar_lea.vmem [#allocation2], %s321
          %s323 = smul.u32 2, %s36
          %s325 = ssub.s32 256, 256
          %326 = vsyncadd %s319, %s325
          %s327 = smul.addr %s35, 2
          %s328 = sadd.s32 %s323, %s327
          %s329 = smul.addr %s328, 128
          %s330 = scalar_lea.hbm %s0, %s329
          %s331 = sshll.u32 %s322, 4
          %s332 = int_to_ptr.vmem [resolvable:$true] %s331
          %337 = dma.hbm_to_vmem [thread:$0]  %s330, 256, %s332, %s319, 128, 128, 8
        $region36: #{tpu_custom_call.1} parent=31 // pred_fallthru
          _
        // Predicated region
        $region37: #{tpu_custom_call.1} parent=31 // pred_check
          %p338 = pneg %p90
        $region38: #{tpu_custom_call.1} parent=31 // pred_check_branch
          %340 = sbr.rel (%p338) target = $region40
        $region39: #{tpu_custom_call.1} parent=31 // pred_region
          %s341 = sand.u32 %s28, 1
          %s342 = scalar_lea.sflag [#allocation6], %s341
          %s343 = sand.u32 %s80, 1
          %s344 = smul.addr %s343, 16
          %s345 = scalar_lea.vmem [#allocation5], %s344
          %s346 = smul.u32 2, %s36
          %s348 = ssub.s32 256, 256
          %349 = vsyncadd %s342, %s348
          %s350 = smul.addr %s35, 2
          %s351 = sadd.s32 %s346, %s350
          %s352 = smul.addr %s351, 128
          %s353 = scalar_lea.hbm %s1, %s352
          %s354 = sshll.u32 %s345, 4
          %s355 = int_to_ptr.vmem [resolvable:$true] %s354
          %360 = dma.hbm_to_vmem [thread:$0]  %s353, 256, %s355, %s342, 128, 128, 8
        $region40: #{tpu_custom_call.1} parent=31 // pred_fallthru
          _
      $region32: #{tpu_custom_call.1} parent=5 // pred_fallthru
        _
      %p361 = scmp.le.s32.totalorder 1, %s28
      %p362 = scmp.lt.s32.totalorder %s28, 3
      %p363 = pnand %p361, %p362
      %p364 = pneg %p363
      // Predicated region
      $region41: #{tpu_custom_call.1} parent=5 // pred_check
        _
      $region42: #{tpu_custom_call.1} parent=5 // pred_check_branch
        %366 = sbr.rel (%p363) target = $region44
      $region43: #{tpu_custom_call.1} parent=5 // pred_region
        %s367 = ssub.s32 %s28, 1
        %s368 = sand.u32 %s55, 1
        %s369 = scalar_lea.sflag [#allocation3], %s368
        %s370 = sand.u32 %s55, 1
        %s371 = smul.addr %s370, 16
        %s372 = scalar_lea.vmem [#allocation2], %s371
        // Predicated region
        $region45: #{tpu_custom_call.1} parent=43 // pred_check
          %p373 = pneg %p68
        $region46: #{tpu_custom_call.1} parent=43 // pred_check_branch
          %375 = sbr.rel (%p373) target = $region48
        $region47: #{tpu_custom_call.1} parent=43 // pred_region
          %376 = dma.done %s369, 256
        $region48: #{tpu_custom_call.1} parent=43 // pred_fallthru
          _
        %s377 = sand.u32 %s33, 1
        %s378 = scalar_lea.sflag [#allocation6], %s377
        %s379 = sand.u32 %s83, 1
        %s380 = smul.addr %s379, 16
        %s381 = scalar_lea.vmem [#allocation5], %s380
        // Predicated region
        $region49: #{tpu_custom_call.1} parent=43 // pred_check
          %p382 = pneg %p96
        $region50: #{tpu_custom_call.1} parent=43 // pred_check_branch
          %384 = sbr.rel (%p382) target = $region52
        $region51: #{tpu_custom_call.1} parent=43 // pred_region
          %385 = dma.done %s378, 256
        $region52: #{tpu_custom_call.1} parent=43 // pred_fallthru
          _
        // Predicated region
        $region53: #{tpu_custom_call.1} parent=43 // pred_check
          %p386 = pneg %p117
        $region54: #{tpu_custom_call.1} parent=43 // pred_check_branch
          %388 = sbr.rel (%p386) target = $region56
        $region55: #{tpu_custom_call.1} parent=43 // pred_region
          %389 = dma.done [#allocation6], 256
        $region56: #{tpu_custom_call.1} parent=43 // pred_fallthru
          _
        // Predicated region
        $region57: #{tpu_custom_call.1} parent=43 // pred_check
          %p390 = pneg %p159
        $region58: #{tpu_custom_call.1} parent=43 // pred_check_branch
          %392 = sbr.rel (%p390) target = $region60
        $region59: #{tpu_custom_call.1} parent=43 // pred_region
          %393 = dma.done [#allocation9], 256
        $region60: #{tpu_custom_call.1} parent=43 // pred_fallthru
          _
        %s394 = sand.u32 %s55, 1
        %s395 = scalar_lea.sflag [#allocation3], %s394
        %s396 = sand.u32 %s55, 1
        %s397 = smul.addr %s396, 16
        %s398 = scalar_lea.vmem [#allocation2], %s397
        %p399 = pneg %p68
        %p400 = pneg %p65
        %s401 = sand.u32 %s33, 1
        %s402 = scalar_lea.sflag [#allocation6], %s401
        %s403 = sand.u32 %s83, 1
        %s404 = smul.addr %s403, 16
        %s405 = scalar_lea.vmem [#allocation5], %s404
        %p406 = pneg %p96
        %p407 = pneg %p93
        %p408 = pneg %p117
        %p409 = pneg %p114
        %p410 = pneg %p138
        %p411 = pneg %p135
        %p412 = pneg %p159
        %p413 = pneg %p156
        %p414 = pneg %p180
        %p415 = pneg %p177
        %p416 = pneg %p208
        %p417 = pneg %p205
        %s418 = sand.u32 %s195, 1
        %s419 = scalar_lea.sflag [#allocation4], %s418
        %s420 = sand.u32 %s195, 1
        %s421 = smul.addr %s420, 16
        %s422 = scalar_lea.vmem [#allocation10], %s421
        %p423 = pneg %p236
        %p424 = pneg %p233
        %s425 = sand.u32 %s33, 1
        %s426 = scalar_lea.sflag [#allocation12], %s425
        %s427 = sand.u32 %s223, 1
        %s428 = smul.addr %s427, 16
        %s429 = scalar_lea.vmem [#allocation11], %s428
        %p430 = pneg %p264
        %p431 = pneg %p261
        %s432 = sand.u32 %s33, 1
        %s433 = scalar_lea.sflag [#allocation12], %s432
        %s434 = sand.u32 %s251, 1
        %s435 = smul.addr %s434, 16
        %s436 = scalar_lea.vmem [#allocation13], %s435
        %s437 = smul.u32 2, %s38
        %s438 = smul.u32 2, %s38
        %s439 = smul.u32 2, %s38
        %s440 = smul.u32 2, %s38
        %s441 = smul.u32 2, %s38
        %v443 = vld [vmem:[%s372] sm:$0xff]
        %v444 = vld [vmem:[%s372 + $0x8] sm:$0xff]
        %v445 = vld [vmem:[%s381] sm:$0xff]
        %v446 = vld [vmem:[%s381 + $0x8] sm:$0xff]
        %v447 = vadd.f32 %v443, %v445
        %v448 = vadd.f32 %v444, %v446
        %v449 = vpack.c.bf16 %v448, %v447
        %v450 = vld [vmem:[#allocation7] sm:$0xf]
        %v451 = vld [vmem:[#allocation7 + $0x4] sm:$0xf]
        %v452 = vld [vmem:[#allocation7 + $0x8] sm:$0xf]
        %v453 = vld [vmem:[#allocation7 + $0xc] sm:$0xf]
        %v454 = vld [vmem:[%s3] sm:$0x1]
        %v456 = vlaneseq
        %v457 = vshrl.u32 %v456, 7
        %v458 = vsub.s32 0, %v457
        %v459 = vrot.slane %v454, %v458
        %v465 = vunpack.c.l.b16 %v450
        %v466 = vunpack.c.l.b16 %v451
        %v467 = vunpack.c.l.b16 %v452
        %v468 = vunpack.c.l.b16 %v453
        %v469 = vpack.c.b16 %v466, %v465
        %v470 = vpack.c.b16 %v468, %v467
        %vm473 = vcmask 261120
        %v475 = vsel %vm473, %v449, 0
        %477 = vmatprep.subr.bf16.mxu0 0
        %478 = vmatpush1.bf16.msra.mxu0 %v469
        %479 = vmatprep.subr.bf16.mxu0 0
        %480 = vmatpush1.bf16.msra.mxu0 %v470
        %481 = vmatprep.subr.bf16.mxu0 0
        %482 = vmatpush1.bf16.msra.mxu0 0
        %483 = vmatprep.subr.bf16.mxu0 0
        %484 = vmatpush1.bf16.msra.mxu0 0
        %485 = vmatprep.subr.bf16.mxu0 0
        %486 = vmatpush1.bf16.msra.mxu0 0
        %487 = vmatprep.subr.bf16.mxu0 0
        %488 = vmatpush1.bf16.msra.mxu0 0
        %489 = vmatprep.subr.bf16.mxu0 0
        %490 = vmatpush1.bf16.msra.mxu0 0
        %491 = vmatprep.subr.bf16.mxu0 0
        %492 = vmatpush1.bf16.msra.mxu0 0
        %493 = vmatprep.subr.bf16.mxu0 0
        %494 = vmatpush1.bf16.msra.mxu0 0
        %495 = vmatprep.subr.bf16.mxu0 0
        %496 = vmatpush1.bf16.msra.mxu0 0
        %497 = vmatprep.subr.bf16.mxu0 0
        %498 = vmatpush1.bf16.msra.mxu0 0
        %499 = vmatprep.subr.bf16.mxu0 0
        %500 = vmatpush1.bf16.msra.mxu0 0
        %501 = vmatprep.subr.bf16.mxu0 0
        %502 = vmatpush1.bf16.msra.mxu0 0
        %503 = vmatprep.subr.bf16.mxu0 0
        %504 = vmatpush1.bf16.msra.mxu0 0
        %505 = vmatprep.subr.bf16.mxu0 0
        %506 = vmatpush1.bf16.msra.mxu0 0
        %507 = vmatprep.subr.bf16.mxu0 0
        %508 = vmatpush1.bf16.msra.mxu0 0
        %509 = vmatprep.mubr.bf16.mxu0 0
        %510 = vmatmul.mubr.bf16.gmra.mrb[0].mxu0 %v475
        %v511 = vpop.f32.mrb[0].mxu0
        %v512 = vadd.f32 %v459, %v511
        %v513 = vpop.f32.mrb[0].mxu0
        %v514 = vpop.f32.mrb[0].mxu0
        %v515 = vadd.f32 %v459, %v514
        %v516 = vpop.f32.mrb[0].mxu0
        %517 = vdwg.mxu0
        %v518 = vadd.f32 %v512, %v443
        %v519 = vadd.f32 %v515, %v444
        %v520 = vpack.c.bf16 %v519, %v518
        %v521 = vld [vmem:[#allocation8] sm:$0xf]
        %v522 = vld [vmem:[#allocation8 + $0x4] sm:$0xf]
        %v523 = vld [vmem:[#allocation8 + $0x8] sm:$0xf]
        %v524 = vld [vmem:[#allocation8 + $0xc] sm:$0xf]
        %v525 = vld [vmem:[%s5] sm:$0x1]
        %v527 = vlaneseq
        %v528 = vshrl.u32 %v527, 7
        %v529 = vsub.s32 0, %v528
        %v530 = vrot.slane %v525, %v529
        %v536 = vunpack.c.l.b16 %v521
        %v537 = vunpack.c.l.b16 %v522
        %v538 = vunpack.c.l.b16 %v523
        %v539 = vunpack.c.l.b16 %v524
        %v540 = vpack.c.b16 %v537, %v536
        %v541 = vpack.c.b16 %v539, %v538
        %v545 = vsel %vm473, %v520, 0
        %547 = vmatprep.subr.bf16.mxu0 0
        %548 = vmatpush1.bf16.msra.mxu0 %v540
        %549 = vmatprep.subr.bf16.mxu0 0
        %550 = vmatpush1.bf16.msra.mxu0 %v541
        %551 = vmatprep.subr.bf16.mxu0 0
        %552 = vmatpush1.bf16.msra.mxu0 0
        %553 = vmatprep.subr.bf16.mxu0 0
        %554 = vmatpush1.bf16.msra.mxu0 0
        %555 = vmatprep.subr.bf16.mxu0 0
        %556 = vmatpush1.bf16.msra.mxu0 0
        %557 = vmatprep.subr.bf16.mxu0 0
        %558 = vmatpush1.bf16.msra.mxu0 0
        %559 = vmatprep.subr.bf16.mxu0 0
        %560 = vmatpush1.bf16.msra.mxu0 0
        %561 = vmatprep.subr.bf16.mxu0 0
        %562 = vmatpush1.bf16.msra.mxu0 0
        %563 = vmatprep.subr.bf16.mxu0 0
        %564 = vmatpush1.bf16.msra.mxu0 0
        %565 = vmatprep.subr.bf16.mxu0 0
        %566 = vmatpush1.bf16.msra.mxu0 0
        %567 = vmatprep.subr.bf16.mxu0 0
        %568 = vmatpush1.bf16.msra.mxu0 0
        %569 = vmatprep.subr.bf16.mxu0 0
        %570 = vmatpush1.bf16.msra.mxu0 0
        %571 = vmatprep.subr.bf16.mxu0 0
        %572 = vmatpush1.bf16.msra.mxu0 0
        %573 = vmatprep.subr.bf16.mxu0 0
        %574 = vmatpush1.bf16.msra.mxu0 0
        %575 = vmatprep.subr.bf16.mxu0 0
        %576 = vmatpush1.bf16.msra.mxu0 0
        %577 = vmatprep.subr.bf16.mxu0 0
        %578 = vmatpush1.bf16.msra.mxu0 0
        %579 = vmatprep.mubr.bf16.mxu0 0
        %580 = vmatmul.mubr.bf16.gmra.mrb[0].mxu0 %v545
        %v581 = vpop.f32.mrb[0].mxu0
        %v582 = vadd.f32 %v530, %v581
        %v583 = vpop.f32.mrb[0].mxu0
        %v584 = vpop.f32.mrb[0].mxu0
        %v585 = vadd.f32 %v530, %v584
        %v586 = vpop.f32.mrb[0].mxu0
        %587 = vdwg.mxu0
        %v588 = vmul.f32 %v582, 0.25
        %v589 = vmul.f32 %v585, 0.25
        %v590 = vpack.c.bf16 %v589, %v588
        %v592 = vunpack.c.l.b16 %v590
        %v593 = vunpack.c.h.b16 %v590
        %v594 = vpack.c.b16 %v592, %v592
        %v595 = vpack.c.b16 %v593, %v593
        %vm598 = vcmask 125952
        %599 = vst.msk [vmem:[%s422] sm:$0xf] %vm598, %v594
        %600 = vst.msk [vmem:[%s422 + $0x4] sm:$0xf] %vm598, %v595
        %v601 = vpack.c.bf16 %v585, %v582
        %v603 = vunpack.c.l.b16 %v601
        %v604 = vunpack.c.h.b16 %v601
        %v605 = vpack.c.b16 %v603, %v603
        %v606 = vpack.c.b16 %v604, %v604
        %607 = vrot.lane.b32.xlu0 %v605, 96
        %v608 = vpop.permute.xlu0 %607
        %609 = vrot.lane.b32.xlu0 %v606, 96
        %v610 = vpop.permute.xlu0 %609
        %613 = vst.msk [vmem:[%s429] sm:$0xf] %vm598, %v608
        %614 = vst.msk [vmem:[%s429 + $0x4] sm:$0xf] %vm598, %v610
        %615 = vrot.lane.b32.xlu0 %v605, 64
        %v616 = vpop.permute.xlu0 %615
        %617 = vrot.lane.b32.xlu0 %v606, 64
        %v618 = vpop.permute.xlu0 %617
        %621 = vst.msk [vmem:[%s436] sm:$0xf] %vm598, %v616
        %622 = vst.msk [vmem:[%s436 + $0x4] sm:$0xf] %vm598, %v618
        %623 = vrot.lane.b32.xlu0 %v594, 112
        %v624 = vpop.permute.xlu0 %623
        %625 = vrot.lane.b32.xlu0 %v595, 112
        %v626 = vpop.permute.xlu0 %625
        %s629 = scalar_lea.vmem %s422, 8 [#allocation10]
        %630 = vst.msk [vmem:[%s629] sm:$0xf] %vm598, %v624
        %631 = vst.msk [vmem:[%s629 + $0x4] sm:$0xf] %vm598, %v626
        %632 = vrot.lane.b32.xlu0 %v605, 80
        %v633 = vpop.permute.xlu0 %632
        %634 = vrot.lane.b32.xlu0 %v606, 80
        %v635 = vpop.permute.xlu0 %634
        %s638 = scalar_lea.vmem %s429, 8 [#allocation11]
        %639 = vst.msk [vmem:[%s638] sm:$0xf] %vm598, %v633
        %640 = vst.msk [vmem:[%s638 + $0x4] sm:$0xf] %vm598, %v635
        %641 = vrot.lane.b32.xlu0 %v605, 48
        %v642 = vpop.permute.xlu0 %641
        %643 = vrot.lane.b32.xlu0 %v606, 48
        %v644 = vpop.permute.xlu0 %643
        %s647 = scalar_lea.vmem %s436, 8 [#allocation13]
        %648 = vst.msk [vmem:[%s647] sm:$0xf] %vm598, %v642
        %649 = vst.msk [vmem:[%s647 + $0x4] sm:$0xf] %vm598, %v644
        %s650 = sand.u32 %s195, 1
        %s651 = scalar_lea.sflag [#allocation4], %s650
        %s652 = sand.u32 %s195, 1
        %s653 = smul.addr %s652, 16
        %s654 = scalar_lea.vmem [#allocation10], %s653
        %s655 = sand.u32 %s33, 1
        %s656 = scalar_lea.sflag [#allocation12], %s655
        %s657 = sand.u32 %s223, 1
        %s658 = smul.addr %s657, 16
        %s659 = scalar_lea.vmem [#allocation11], %s658
        %s660 = sand.u32 %s33, 1
        %s661 = scalar_lea.sflag [#allocation12], %s660
        %s662 = sand.u32 %s251, 1
        %s663 = smul.addr %s662, 16
        %s664 = scalar_lea.vmem [#allocation13], %s663
        // Predicated region
        $region61: #{tpu_custom_call.1} parent=43 // pred_check
          %p665 = pneg %p205
        $region62: #{tpu_custom_call.1} parent=43 // pred_check_branch
          %667 = sbr.rel (%p665) target = $region64
        $region63: #{tpu_custom_call.1} parent=43 // pred_region
          %s668 = smul.u32 2, %s38
          %s670 = ssub.s32 256, 256
          %671 = vsyncadd %s651, %s670
          %s672 = smul.addr %s37, 4
          %s673 = sadd.s32 %s668, %s672
          %s674 = smul.addr %s673, 64
          %s675 = scalar_lea.hbm %s6, %s674
          %s676 = sshll.u32 %s654, 4
          %s677 = int_to_ptr.vmem [resolvable:$true] %s676
          %682 = dma.vmem_to_hbm [thread:$0]  %s677, 256, %s675, %s651, 64, 64, 4
        $region64: #{tpu_custom_call.1} parent=43 // pred_fallthru
          _
        // Predicated region
        $region65: #{tpu_custom_call.1} parent=43 // pred_check
          %p683 = pneg %p233
        $region66: #{tpu_custom_call.1} parent=43 // pred_check_branch
          %685 = sbr.rel (%p683) target = $region68
        $region67: #{tpu_custom_call.1} parent=43 // pred_region
          %s686 = smul.u32 2, %s38
          %s688 = ssub.s32 256, 256
          %689 = vsyncadd %s656, %s688
          %s690 = smul.addr %s37, 4
          %s691 = sadd.s32 %s686, %s690
          %s692 = smul.addr %s691, 64
          %s693 = scalar_lea.hbm %s7, %s692
          %s694 = sshll.u32 %s659, 4
          %s695 = int_to_ptr.vmem [resolvable:$true] %s694
          %700 = dma.vmem_to_hbm [thread:$0]  %s695, 256, %s693, %s656, 64, 64, 4
        $region68: #{tpu_custom_call.1} parent=43 // pred_fallthru
          _
        // Predicated region
        $region69: #{tpu_custom_call.1} parent=43 // pred_check
          %p701 = pneg %p261
        $region70: #{tpu_custom_call.1} parent=43 // pred_check_branch
          %703 = sbr.rel (%p701) target = $region72
        $region71: #{tpu_custom_call.1} parent=43 // pred_region
          %s704 = smul.u32 2, %s38
          %s706 = ssub.s32 256, 256
          %707 = vsyncadd %s661, %s706
          %s708 = smul.addr %s37, 4
          %s709 = sadd.s32 %s704, %s708
          %s710 = smul.addr %s709, 64
          %s711 = scalar_lea.hbm %s8, %s710
          %s712 = sshll.u32 %s664, 4
          %s713 = int_to_ptr.vmem [resolvable:$true] %s712
          %718 = dma.vmem_to_hbm [thread:$0]  %s713, 256, %s711, %s661, 64, 64, 4
        $region72: #{tpu_custom_call.1} parent=43 // pred_fallthru
          _
      $region44: #{tpu_custom_call.1} parent=5 // pred_fallthru
        _
      %p719 = scmp.le.s32.totalorder 2, %s28
      // Predicated region
      $region73: #{tpu_custom_call.1} parent=5 // pred_check
        %p720 = pneg %p719
      $region74: #{tpu_custom_call.1} parent=5 // pred_check_branch
        %722 = sbr.rel (%p720) target = $region76
      $region75: #{tpu_custom_call.1} parent=5 // pred_region
        %s723 = ssub.s32 %s28, 2
        // Predicated region
        $region77: #{tpu_custom_call.1} parent=75 // pred_check
          %p724 = pneg %p211
        $region78: #{tpu_custom_call.1} parent=75 // pred_check_branch
          %726 = sbr.rel (%p724) target = $region80
        $region79: #{tpu_custom_call.1} parent=75 // pred_region
          %s727 = sand.u32 %s196, 1
          %s728 = scalar_lea.sflag [#allocation4], %s727
          %s729 = sand.u32 %s196, 1
          %s730 = smul.addr %s729, 16
          %s731 = scalar_lea.vmem [#allocation10], %s730
          %732 = dma.done %s728, 256
        $region80: #{tpu_custom_call.1} parent=75 // pred_fallthru
          _
        // Predicated region
        $region81: #{tpu_custom_call.1} parent=75 // pred_check
          %p733 = pneg %p239
        $region82: #{tpu_custom_call.1} parent=75 // pred_check_branch
          %735 = sbr.rel (%p733) target = $region84
        $region83: #{tpu_custom_call.1} parent=75 // pred_region
          %s736 = sand.u32 %s34, 1
          %s737 = scalar_lea.sflag [#allocation12], %s736
          %s738 = sand.u32 %s224, 1
          %s739 = smul.addr %s738, 16
          %s740 = scalar_lea.vmem [#allocation11], %s739
          %741 = dma.done %s737, 256
        $region84: #{tpu_custom_call.1} parent=75 // pred_fallthru
          _
        // Predicated region
        $region85: #{tpu_custom_call.1} parent=75 // pred_check
          %p742 = pneg %p267
        $region86: #{tpu_custom_call.1} parent=75 // pred_check_branch
          %744 = sbr.rel (%p742) target = $region88
        $region87: #{tpu_custom_call.1} parent=75 // pred_region
          %s745 = sand.u32 %s34, 1
          %s746 = scalar_lea.sflag [#allocation12], %s745
          %s747 = sand.u32 %s252, 1
          %s748 = smul.addr %s747, 16
          %s749 = scalar_lea.vmem [#allocation13], %s748
          %750 = dma.done %s746, 256
        $region88: #{tpu_custom_call.1} parent=75 // pred_fallthru
          _
      $region76: #{tpu_custom_call.1} parent=5 // pred_fallthru
        _
    $region6: #{tpu_custom_call.1} parent=1 // loop_footer
      %s32 = sadd.s32 1, %s28
    $region7: #{tpu_custom_call.1} parent=1 // loop_footer_branch
      %27 = sbr.rel target = $region3
    $region8: #{tpu_custom_call.1} parent=1 // loop_exit
      _
    %751 = vsyncpa [#allocation3], 1
    %s752 = scalar_lea.sflag [#allocation3], 1
    %753 = vsyncpa %s752, 1
    %754 = vsyncpa [#allocation6], 1
    %s755 = scalar_lea.sflag [#allocation6], 1
    %756 = vsyncpa %s755, 1
    %757 = vsyncpa [#allocation9], 1
    %758 = vsyncpa [#allocation4], 1
    %s759 = scalar_lea.sflag [#allocation4], 1
    %760 = vsyncpa %s759, 1
    %761 = vsyncpa [#allocation12], 1
    %s762 = scalar_lea.sflag [#allocation12], 1
    %763 = vsyncpa %s762, 1

</llo_original>
